<compile_context>
chip_gen: v7x
topology: tpu7x:2x2x1
jax: 0.10.0
libtpu: 0.0.40
codegen_flags: <defaults>
</compile_context>

<pallas_src>
import functools

import jax
import jax.numpy as jnp
from jax.experimental import pallas as pl
from jax.experimental.pallas import tpu as pltpu

N_COLS = 32
THETA = 7
DEPTH = 3
BATCH = 8

LANE = 128        # padded feature width (lane-dense activations & stores)
MAX_TILE_B = 256  # row tile for large batches


def _dae_kernel(x_ref, w_ref, b_ref, out_ref, *, n_layers):
    """x_ref: (TILE_B, 128); w_ref: (n_layers, 128, 128); b_ref: (n_layers, 1, 128)."""
    h = x_ref[...]
    for l in range(n_layers):  # statically unrolled: 5 MXU matmuls + EUP tanh
        h = jnp.dot(h, w_ref[l], preferred_element_type=jnp.float32) + b_ref[l]
        if l != n_layers - 1:  # tanh after every (fused) layer except the last
            h = jnp.tanh(h)
    out_ref[...] = h


def pack_params(params):
    """One-time prep: fuse the two consecutive no-activation linears
    (enc[-1] 46->53 and dec[0] 53->46) and pack into zero-padded slabs."""
    hi = jax.lax.Precision.HIGHEST
    ws = [w for w, _ in params]
    bs = [b for _, b in params]

    # No tanh between layers DEPTH-1 and DEPTH (dropout identity at eval):
    #   W_f = W_enc_last @ W_dec_first ; b_f = b_enc_last @ W_dec_first + b_dec_first
    w_f = jnp.dot(ws[DEPTH - 1], ws[DEPTH], precision=hi)
    b_f = jnp.dot(bs[DEPTH - 1], ws[DEPTH], precision=hi) + bs[DEPTH]
    ws = ws[: DEPTH - 1] + [w_f] + ws[DEPTH + 1:]
    bs = bs[: DEPTH - 1] + [b_f] + bs[DEPTH + 1:]

    n_layers = len(ws)
    w_slab = jnp.zeros((n_layers, LANE, LANE), jnp.float32)
    b_slab = jnp.zeros((n_layers, 1, LANE), jnp.float32)
    for l, (w, b) in enumerate(zip(ws, bs)):
        d_in, d_out = w.shape
        w_slab = w_slab.at[l, :d_in, :d_out].set(w)
        b_slab = b_slab.at[l, 0, :d_out].set(b)
    return w_slab, b_slab


@jax.jit
def dae_forward_packed(x, w_slab, b_slab):
    """x: [batch, n_cols] f32; slabs from pack_params. Single-dispatch forward."""
    batch, n_cols = x.shape
    n_layers = w_slab.shape[0]

    tile_b = min(MAX_TILE_B, max(8, -(-batch // 8) * 8))
    b_pad = pl.cdiv(batch, tile_b) * tile_b

    # Lane-dense, zero-padded input slab [b_pad, 128].
    x_pad = jnp.zeros((b_pad, LANE), jnp.float32).at[:batch, :n_cols].set(x)

    out = pl.pallas_call(
        functools.partial(_dae_kernel, n_layers=n_layers),
        out_shape=jax.ShapeDtypeStruct((b_pad, LANE), jnp.float32),
        grid=(b_pad // tile_b,),
        in_specs=[
            pl.BlockSpec((tile_b, LANE), lambda i: (i, 0)),
            pl.BlockSpec((n_layers, LANE, LANE), lambda i: (0, 0, 0)),  # resident
            pl.BlockSpec((n_layers, 1, LANE), lambda i: (0, 0, 0)),     # resident
        ],
        out_specs=pl.BlockSpec((tile_b, LANE), lambda i: (i, 0)),
        compiler_params=pltpu.CompilerParams(
            dimension_semantics=("parallel",)),
    )(x_pad, w_slab, b_slab)
    return out[:batch, :n_cols]


def dae_forward(x, params):
    """Convenience wrapper: pack params then run the fused Pallas forward."""
    w_slab, b_slab = pack_params(params)
    return dae_forward_packed(x, w_slab, b_slab)


def init_params(key):
    """Deterministic init matching nn.Linear default U(-1/sqrt(fan_in), 1/sqrt(fan_in))."""
    dims = [N_COLS + THETA * i for i in range(DEPTH + 1)]           # [32, 39, 46, 53]
    enc_io = list(zip(dims[:-1], dims[1:]))                         # 32->39->46->53
    dec_io = list(zip(dims[::-1][:-1], dims[::-1][1:]))             # 53->46->39->32
    params = []
    for d_in, d_out in enc_io + dec_io:
        key, kw, kb = jax.random.split(key, 3)
        bound = 1.0 / float(jnp.sqrt(jnp.float32(d_in)))
        w = jax.random.uniform(kw, (d_in, d_out), jnp.float32, -bound, bound)
        b = jax.random.uniform(kb, (d_out,), jnp.float32, -bound, bound)
        params.append((w, b))
    return params


def dae_reference(x, params):
    """Pure-JAX reference of the original (unfused) forward pass (dropout at eval)."""
    hi = jax.lax.Precision.HIGHEST
    h = x
    n = len(params)
    for l, (w, b) in enumerate(params):
        h = jnp.dot(h, w, precision=hi) + b
        if l != DEPTH - 1 and l != n - 1:  # no tanh after enc[-1] and dec[-1]
            h = jnp.tanh(h)
    return h


if __name__ == "__main__":
    key = jax.random.PRNGKey(0)
    key_x, key_p = jax.random.split(key)

    x = jax.random.normal(key_x, (BATCH, N_COLS), dtype=jnp.float32)
    params = init_params(key_p)

    out = jax.block_until_ready(dae_forward(x, params))
    ref = dae_reference(x, params)

    assert out.shape == (BATCH, N_COLS), out.shape
    max_err = float(jnp.max(jnp.abs(out - ref)))
    assert jnp.allclose(out, ref, atol=1e-4, rtol=1e-4), max_err
    print("KERNEL_OK")
</pallas_src>

<mosaic_0001>
module attributes {stable_mosaic.version = 11 : i64} {
  func.func @_dae_kernel(%arg0: i32, %arg1: memref<8x128xf32, #tpu.memory_space<vmem>>, %arg2: memref<5x128x128xf32, #tpu.memory_space<vmem>>, %arg3: memref<5x1x128xf32, #tpu.memory_space<vmem>>, %arg4: memref<8x128xf32, #tpu.memory_space<vmem>>) attributes {dimension_semantics = [#tpu.dimension_semantics<parallel>], iteration_bounds = array<i64: 1>, scalar_prefetch = 0 : i64, scratch_operands = 0 : i64, tpu.core_type = #tpu.core_type<tc>, window_params = [{transform_indices = @transform_0, window_bounds = array<i64: 8, 128>}, {pipeline_mode = #tpu.pipeline_mode<synchronous>, transform_indices = @transform_1, window_bounds = array<i64: 5, 128, 128>}, {pipeline_mode = #tpu.pipeline_mode<synchronous>, transform_indices = @transform_2, window_bounds = array<i64: 5, 1, 128>}, {transform_indices = @transform_3, window_bounds = array<i64: 8, 128>}]} {
    %c0 = arith.constant 0 : index
    %c0_0 = arith.constant 0 : index
    %0 = vector.load %arg1[%c0, %c0_0] : memref<8x128xf32, #tpu.memory_space<vmem>>, vector<8x128xf32>
    %c0_1 = arith.constant 0 : index
    %c0_2 = arith.constant 0 : index
    %c0_3 = arith.constant 0 : index
    %1 = vector.load %arg2[%c0_1, %c0_2, %c0_3] : memref<5x128x128xf32, #tpu.memory_space<vmem>>, vector<1x128x128xf32>
    %2 = vector.shape_cast %1 : vector<1x128x128xf32> to vector<128x128xf32>
    %cst = arith.constant dense<0.000000e+00> : vector<8x128xf32>
    %3 = tpu.matmul %0, %2, %cst {dimension_numbers = #tpu.dot_dimension_numbers<[1], [0], [0], [1], [0, 0, 1, 1], [], []>} : vector<8x128xf32>, vector<128x128xf32>, vector<8x128xf32> -> vector<8x128xf32>
    %c0_4 = arith.constant 0 : index
    %c0_5 = arith.constant 0 : index
    %c0_6 = arith.constant 0 : index
    %4 = vector.load %arg3[%c0_4, %c0_5, %c0_6] : memref<5x1x128xf32, #tpu.memory_space<vmem>>, vector<1x1x128xf32>
    %5 = vector.shape_cast %4 : vector<1x1x128xf32> to vector<1x128xf32>
    %6 = vector.broadcast %5 : vector<1x128xf32> to vector<8x128xf32>
    %7 = arith.addf %3, %6 : vector<8x128xf32>
    %8 = math.tanh %7 : vector<8x128xf32>
    %c1 = arith.constant 1 : index
    %c0_7 = arith.constant 0 : index
    %c0_8 = arith.constant 0 : index
    %9 = vector.load %arg2[%c1, %c0_7, %c0_8] : memref<5x128x128xf32, #tpu.memory_space<vmem>>, vector<1x128x128xf32>
    %10 = vector.shape_cast %9 : vector<1x128x128xf32> to vector<128x128xf32>
    %cst_9 = arith.constant dense<0.000000e+00> : vector<8x128xf32>
    %11 = tpu.matmul %8, %10, %cst_9 {dimension_numbers = #tpu.dot_dimension_numbers<[1], [0], [0], [1], [0, 0, 1, 1], [], []>} : vector<8x128xf32>, vector<128x128xf32>, vector<8x128xf32> -> vector<8x128xf32>
    %c1_10 = arith.constant 1 : index
    %c0_11 = arith.constant 0 : index
    %c0_12 = arith.constant 0 : index
    %12 = vector.load %arg3[%c1_10, %c0_11, %c0_12] : memref<5x1x128xf32, #tpu.memory_space<vmem>>, vector<1x1x128xf32>
    %13 = vector.shape_cast %12 : vector<1x1x128xf32> to vector<1x128xf32>
    %14 = vector.broadcast %13 : vector<1x128xf32> to vector<8x128xf32>
    %15 = arith.addf %11, %14 : vector<8x128xf32>
    %16 = math.tanh %15 : vector<8x128xf32>
    %c2 = arith.constant 2 : index
    %c0_13 = arith.constant 0 : index
    %c0_14 = arith.constant 0 : index
    %17 = vector.load %arg2[%c2, %c0_13, %c0_14] : memref<5x128x128xf32, #tpu.memory_space<vmem>>, vector<1x128x128xf32>
    %18 = vector.shape_cast %17 : vector<1x128x128xf32> to vector<128x128xf32>
    %cst_15 = arith.constant dense<0.000000e+00> : vector<8x128xf32>
    %19 = tpu.matmul %16, %18, %cst_15 {dimension_numbers = #tpu.dot_dimension_numbers<[1], [0], [0], [1], [0, 0, 1, 1], [], []>} : vector<8x128xf32>, vector<128x128xf32>, vector<8x128xf32> -> vector<8x128xf32>
    %c2_16 = arith.constant 2 : index
    %c0_17 = arith.constant 0 : index
    %c0_18 = arith.constant 0 : index
    %20 = vector.load %arg3[%c2_16, %c0_17, %c0_18] : memref<5x1x128xf32, #tpu.memory_space<vmem>>, vector<1x1x128xf32>
    %21 = vector.shape_cast %20 : vector<1x1x128xf32> to vector<1x128xf32>
    %22 = vector.broadcast %21 : vector<1x128xf32> to vector<8x128xf32>
    %23 = arith.addf %19, %22 : vector<8x128xf32>
    %24 = math.tanh %23 : vector<8x128xf32>
    %c3 = arith.constant 3 : index
    %c0_19 = arith.constant 0 : index
    %c0_20 = arith.constant 0 : index
    %25 = vector.load %arg2[%c3, %c0_19, %c0_20] : memref<5x128x128xf32, #tpu.memory_space<vmem>>, vector<1x128x128xf32>
    %26 = vector.shape_cast %25 : vector<1x128x128xf32> to vector<128x128xf32>
    %cst_21 = arith.constant dense<0.000000e+00> : vector<8x128xf32>
    %27 = tpu.matmul %24, %26, %cst_21 {dimension_numbers = #tpu.dot_dimension_numbers<[1], [0], [0], [1], [0, 0, 1, 1], [], []>} : vector<8x128xf32>, vector<128x128xf32>, vector<8x128xf32> -> vector<8x128xf32>
    %c3_22 = arith.constant 3 : index
    %c0_23 = arith.constant 0 : index
    %c0_24 = arith.constant 0 : index
    %28 = vector.load %arg3[%c3_22, %c0_23, %c0_24] : memref<5x1x128xf32, #tpu.memory_space<vmem>>, vector<1x1x128xf32>
    %29 = vector.shape_cast %28 : vector<1x1x128xf32> to vector<1x128xf32>
    %30 = vector.broadcast %29 : vector<1x128xf32> to vector<8x128xf32>
    %31 = arith.addf %27, %30 : vector<8x128xf32>
    %32 = math.tanh %31 : vector<8x128xf32>
    %c4 = arith.constant 4 : index
    %c0_25 = arith.constant 0 : index
    %c0_26 = arith.constant 0 : index
    %33 = vector.load %arg2[%c4, %c0_25, %c0_26] : memref<5x128x128xf32, #tpu.memory_space<vmem>>, vector<1x128x128xf32>
    %34 = vector.shape_cast %33 : vector<1x128x128xf32> to vector<128x128xf32>
    %cst_27 = arith.constant dense<0.000000e+00> : vector<8x128xf32>
    %35 = tpu.matmul %32, %34, %cst_27 {dimension_numbers = #tpu.dot_dimension_numbers<[1], [0], [0], [1], [0, 0, 1, 1], [], []>} : vector<8x128xf32>, vector<128x128xf32>, vector<8x128xf32> -> vector<8x128xf32>
    %c4_28 = arith.constant 4 : index
    %c0_29 = arith.constant 0 : index
    %c0_30 = arith.constant 0 : index
    %36 = vector.load %arg3[%c4_28, %c0_29, %c0_30] : memref<5x1x128xf32, #tpu.memory_space<vmem>>, vector<1x1x128xf32>
    %37 = vector.shape_cast %36 : vector<1x1x128xf32> to vector<1x128xf32>
    %38 = vector.broadcast %37 : vector<1x128xf32> to vector<8x128xf32>
    %39 = arith.addf %35, %38 : vector<8x128xf32>
    %c0_31 = arith.constant 0 : index
    %c0_32 = arith.constant 0 : index
    %40 = vector.load %arg4[%c0_31, %c0_32] : memref<8x128xf32, #tpu.memory_space<vmem>>, vector<8x128xf32>
    tpu.vector_store %arg4[%c0_31, %c0_32], %39 {strides = array<i32>} : memref<8x128xf32, #tpu.memory_space<vmem>>, vector<8x128xf32>,
    return
  }
  func.func @transform_0(%arg0: i32) -> (i32, i32) {
    %c0_i32 = arith.constant 0 : i32
    %c0_i32_0 = arith.constant 0 : i32
    return %arg0, %c0_i32 : i32, i32
  }
  func.func @transform_1(%arg0: i32) -> (i32, i32, i32) {
    %c0_i32 = arith.constant 0 : i32
    %c0_i32_0 = arith.constant 0 : i32
    %c0_i32_1 = arith.constant 0 : i32
    %c0_i32_2 = arith.constant 0 : i32
    return %c0_i32, %c0_i32_0, %c0_i32_1 : i32, i32, i32
  }
  func.func @transform_2(%arg0: i32) -> (i32, i32, i32) {
    %c0_i32 = arith.constant 0 : i32
    %c0_i32_0 = arith.constant 0 : i32
    %c0_i32_1 = arith.constant 0 : i32
    %c0_i32_2 = arith.constant 0 : i32
    return %c0_i32, %c0_i32_0, %c0_i32_1 : i32, i32, i32
  }
  func.func @transform_3(%arg0: i32) -> (i32, i32) {
    %c0_i32 = arith.constant 0 : i32
    %c0_i32_0 = arith.constant 0 : i32
    return %arg0, %c0_i32 : i32, i32
  }
}

</mosaic_0001>

<llo_original>
// kernel: dae_forward_packed.1
$region0: #{dae_forward_packed.1}
  #allocation0 [shape = 'u32[]', space=smem, size = 0x4, offset = 0x4, fixed_abs, tag = 'smem constant byte address 0x4 - core index']
  #allocation1 [shape = 'u32[144,128]{1,0:T(1,128)}', space=vmem, size = 0x12000, scoped, tag = 'internal scratch']
  %s0 = inlined_call_operand.vmem [shape: f32[8,128], index: 0, kind: input, shape index: {}]
  %s1 = inlined_call_operand.hbm [shape: f32[5,128,128], index: 1, kind: input, shape index: {}]
  %s2 = inlined_call_operand.vmem [shape: f32[5,1,128], index: 2, kind: input, shape index: {}]
  %s3 = inlined_call_operand.hbm [shape: f32[8,128], index: 3, kind: output, shape index: {}]
  %s4 = sld [smem:[#allocation0]]
  $region26: #{dae_forward_packed.1} parent=0
    _
  %s6 = ssub.s32 1, %s4
  %s7 = scalar_select 0, %s6, %s4
  $region1: #{dae_forward_packed.1} parent=0
    #allocation2 [shape = 'u8[327680]{0}', space=vmem, size = 0x50000, scoped, tag = 'input window, operand 1, single buffered']
    #allocation3 [shape = 's32[1]{0}', space=sflag, size = 0x4, scoped, tag = 'scoped memory for dae_forward_packed.1']
    #allocation4 [shape = 's32[1]{0}', space=sflag, size = 0x4, scoped, tag = 'scoped memory for dae_forward_packed.1']
    #allocation5 [shape = 'u8[4096]{0}', space=vmem, size = 0x1000, scoped, tag = 'output window, operand 0, single buffered']
    %8 = vsyncpa [#allocation3], 0
    %9 = vsyncpa [#allocation4], 0
    // Predicated region
    $region2: #{dae_forward_packed.1} parent=1 // pred_check
      _
    $region3: #{dae_forward_packed.1} parent=1 // pred_check_branch
      %11 = sbr.rel (0) target = $region5
    $region4: #{dae_forward_packed.1} parent=1 // pred_region
      _
    $region5: #{dae_forward_packed.1} parent=1 // pred_fallthru
      _
    // Predicated region
    $region6: #{dae_forward_packed.1} parent=1 // pred_check
      _
    $region7: #{dae_forward_packed.1} parent=1 // pred_check_branch
      %13 = sbr.rel (0) target = $region9
    $region8: #{dae_forward_packed.1} parent=1 // pred_region
      %s15 = ssub.s32 10240, 10240
      %16 = vsyncadd [#allocation3], %s15
      %s17 = sshll.u32 [#allocation2], 4
      %s18 = int_to_ptr.vmem [resolvable:$true] %s17
      %23 = dma.hbm_to_vmem [thread:$0]  %s1, 10240, %s18, [#allocation3], 128, 128, 8
    $region9: #{dae_forward_packed.1} parent=1 // pred_fallthru
      _
    // Predicated region
    $region10: #{dae_forward_packed.1} parent=1 // pred_check
      _
    $region11: #{dae_forward_packed.1} parent=1 // pred_check_branch
      %25 = sbr.rel (0) target = $region13
    $region12: #{dae_forward_packed.1} parent=1 // pred_region
      _
    $region13: #{dae_forward_packed.1} parent=1 // pred_fallthru
      _
    // Predicated region
    $region14: #{dae_forward_packed.1} parent=1 // pred_check
      _
    $region15: #{dae_forward_packed.1} parent=1 // pred_check_branch
      %27 = sbr.rel (0) target = $region17
    $region16: #{dae_forward_packed.1} parent=1 // pred_region
      %28 = dma.done [#allocation3], 10240
    $region17: #{dae_forward_packed.1} parent=1 // pred_fallthru
      _
    %v29 = vld [vmem:[%s0] sm:$0xff]
    %v30 = vld [vmem:[#allocation2] sm:$0xff]
    %v31 = vld [vmem:[#allocation2 + $0x8] sm:$0xff]
    %v32 = vld [vmem:[#allocation2 + $0x10] sm:$0xff]
    %v33 = vld [vmem:[#allocation2 + $0x18] sm:$0xff]
    %v34 = vld [vmem:[#allocation2 + $0x20] sm:$0xff]
    %v35 = vld [vmem:[#allocation2 + $0x28] sm:$0xff]
    %v36 = vld [vmem:[#allocation2 + $0x30] sm:$0xff]
    %v37 = vld [vmem:[#allocation2 + $0x38] sm:$0xff]
    %v38 = vld [vmem:[#allocation2 + $0x40] sm:$0xff]
    %v39 = vld [vmem:[#allocation2 + $0x48] sm:$0xff]
    %v40 = vld [vmem:[#allocation2 + $0x50] sm:$0xff]
    %v41 = vld [vmem:[#allocation2 + $0x58] sm:$0xff]
    %v42 = vld [vmem:[#allocation2 + $0x60] sm:$0xff]
    %v43 = vld [vmem:[#allocation2 + $0x68] sm:$0xff]
    %v44 = vld [vmem:[#allocation2 + $0x70] sm:$0xff]
    %v45 = vld [vmem:[#allocation2 + $0x78] sm:$0xff]
    %v46 = vld [vmem:[%s2] sm:$0x1]
    %v48 = vlaneseq
    %v49 = vshrl.u32 %v48, 7
    %v50 = vsub.s32 0, %v49
    %v51 = vrot.slane %v46, %v50
    %53 = vmatprep.subr.mxu0 0.0
    %54 = vmatpush1.msra.mxu0 %v30
    %55 = vmatprep.subr.mxu0 0.0
    %56 = vmatpush1.msra.mxu0 %v31
    %57 = vmatprep.subr.mxu0 0.0
    %58 = vmatpush1.msra.mxu0 %v32
    %59 = vmatprep.subr.mxu0 0.0
    %60 = vmatpush1.msra.mxu0 %v33
    %61 = vmatprep.subr.mxu0 0.0
    %62 = vmatpush1.msra.mxu0 %v34
    %63 = vmatprep.subr.mxu0 0.0
    %64 = vmatpush1.msra.mxu0 %v35
    %65 = vmatprep.subr.mxu0 0.0
    %66 = vmatpush1.msra.mxu0 %v36
    %67 = vmatprep.subr.mxu0 0.0
    %68 = vmatpush1.msra.mxu0 %v37
    %69 = vmatprep.subr.mxu0 0.0
    %70 = vmatpush1.msra.mxu0 %v38
    %71 = vmatprep.subr.mxu0 0.0
    %72 = vmatpush1.msra.mxu0 %v39
    %73 = vmatprep.subr.mxu0 0.0
    %74 = vmatpush1.msra.mxu0 %v40
    %75 = vmatprep.subr.mxu0 0.0
    %76 = vmatpush1.msra.mxu0 %v41
    %77 = vmatprep.subr.mxu0 0.0
    %78 = vmatpush1.msra.mxu0 %v42
    %79 = vmatprep.subr.mxu0 0.0
    %80 = vmatpush1.msra.mxu0 %v43
    %81 = vmatprep.subr.mxu0 0.0
    %82 = vmatpush1.msra.mxu0 %v44
    %83 = vmatprep.subr.mxu0 0.0
    %84 = vmatpush1.msra.mxu0 %v45
    %85 = vmatprep.subr.mxu0 0.0
    %86 = vmatpush1.msra.mxu0 0.0
    %87 = vmatprep.subr.mxu0 0.0
    %88 = vmatpush1.msra.mxu0 0.0
    %89 = vmatprep.subr.mxu0 0.0
    %90 = vmatpush1.msra.mxu0 0.0
    %91 = vmatprep.subr.mxu0 0.0
    %92 = vmatpush1.msra.mxu0 0.0
    %93 = vmatprep.subr.mxu0 0.0
    %94 = vmatpush1.msra.mxu0 0.0
    %95 = vmatprep.subr.mxu0 0.0
    %96 = vmatpush1.msra.mxu0 0.0
    %97 = vmatprep.subr.mxu0 0.0
    %98 = vmatpush1.msra.mxu0 0.0
    %99 = vmatprep.subr.mxu0 0.0
    %100 = vmatpush1.msra.mxu0 0.0
    %101 = vmatprep.subr.mxu0 0.0
    %102 = vmatpush1.msra.mxu0 0.0
    %103 = vmatprep.subr.mxu0 0.0
    %104 = vmatpush1.msra.mxu0 0.0
    %105 = vmatprep.subr.mxu0 0.0
    %106 = vmatpush1.msra.mxu0 0.0
    %107 = vmatprep.subr.mxu0 0.0
    %108 = vmatpush1.msra.mxu0 0.0
    %109 = vmatprep.subr.mxu0 0.0
    %110 = vmatpush1.msra.mxu0 0.0
    %111 = vmatprep.subr.mxu0 0.0
    %112 = vmatpush1.msra.mxu0 0.0
    %113 = vmatprep.subr.mxu0 0.0
    %114 = vmatpush1.msra.mxu0 0.0
    %115 = vmatprep.subr.mxu0 0.0
    %116 = vmatpush1.msra.mxu0 0.0
    %117 = vmatprep.mubr.f32.mxu0 0.0
    %118 = vmatmul.mubr.f32.gmra.mrb[0].mxu0 %v29
    %v119 = vpop.f32.mrb[0].mxu0
    %v120 = vadd.f32 %v51, %v119
    %v121 = vpop.f32.mrb[0].mxu0
    %122 = vdwg.mxu0
    %v123 = vtanh.pop %v120
    %s124 = scalar_lea.vmem [#allocation2], 128
    %v125 = vld [vmem:[%s124] sm:$0xff]
    %v126 = vld [vmem:[%s124 + $0x8] sm:$0xff]
    %v127 = vld [vmem:[%s124 + $0x10] sm:$0xff]
    %v128 = vld [vmem:[%s124 + $0x18] sm:$0xff]
    %v129 = vld [vmem:[%s124 + $0x20] sm:$0xff]
    %v130 = vld [vmem:[%s124 + $0x28] sm:$0xff]
    %v131 = vld [vmem:[%s124 + $0x30] sm:$0xff]
    %v132 = vld [vmem:[%s124 + $0x38] sm:$0xff]
    %v133 = vld [vmem:[%s124 + $0x40] sm:$0xff]
    %v134 = vld [vmem:[%s124 + $0x48] sm:$0xff]
    %v135 = vld [vmem:[%s124 + $0x50] sm:$0xff]
    %v136 = vld [vmem:[%s124 + $0x58] sm:$0xff]
    %v137 = vld [vmem:[%s124 + $0x60] sm:$0xff]
    %v138 = vld [vmem:[%s124 + $0x68] sm:$0xff]
    %v139 = vld [vmem:[%s124 + $0x70] sm:$0xff]
    %v140 = vld [vmem:[%s124 + $0x78] sm:$0xff]
    %s141 = scalar_lea.vmem %s2, 1
    %v142 = vld [vmem:[%s141] sm:$0x1]
    %v144 = vlaneseq
    %v145 = vshrl.u32 %v144, 7
    %v146 = vsub.s32 0, %v145
    %v147 = vrot.slane %v142, %v146
    %149 = vmatprep.subr.mxu0 0.0
    %150 = vmatpush1.msra.mxu0 %v125
    %151 = vmatprep.subr.mxu0 0.0
    %152 = vmatpush1.msra.mxu0 %v126
    %153 = vmatprep.subr.mxu0 0.0
    %154 = vmatpush1.msra.mxu0 %v127
    %155 = vmatprep.subr.mxu0 0.0
    %156 = vmatpush1.msra.mxu0 %v128
    %157 = vmatprep.subr.mxu0 0.0
    %158 = vmatpush1.msra.mxu0 %v129
    %159 = vmatprep.subr.mxu0 0.0
    %160 = vmatpush1.msra.mxu0 %v130
    %161 = vmatprep.subr.mxu0 0.0
    %162 = vmatpush1.msra.mxu0 %v131
    %163 = vmatprep.subr.mxu0 0.0
    %164 = vmatpush1.msra.mxu0 %v132
    %165 = vmatprep.subr.mxu0 0.0
    %166 = vmatpush1.msra.mxu0 %v133
    %167 = vmatprep.subr.mxu0 0.0
    %168 = vmatpush1.msra.mxu0 %v134
    %169 = vmatprep.subr.mxu0 0.0
    %170 = vmatpush1.msra.mxu0 %v135
    %171 = vmatprep.subr.mxu0 0.0
    %172 = vmatpush1.msra.mxu0 %v136
    %173 = vmatprep.subr.mxu0 0.0
    %174 = vmatpush1.msra.mxu0 %v137
    %175 = vmatprep.subr.mxu0 0.0
    %176 = vmatpush1.msra.mxu0 %v138
    %177 = vmatprep.subr.mxu0 0.0
    %178 = vmatpush1.msra.mxu0 %v139
    %179 = vmatprep.subr.mxu0 0.0
    %180 = vmatpush1.msra.mxu0 %v140
    %181 = vmatprep.subr.mxu0 0.0
    %182 = vmatpush1.msra.mxu0 0.0
    %183 = vmatprep.subr.mxu0 0.0
    %184 = vmatpush1.msra.mxu0 0.0
    %185 = vmatprep.subr.mxu0 0.0
    %186 = vmatpush1.msra.mxu0 0.0
    %187 = vmatprep.subr.mxu0 0.0
    %188 = vmatpush1.msra.mxu0 0.0
    %189 = vmatprep.subr.mxu0 0.0
    %190 = vmatpush1.msra.mxu0 0.0
    %191 = vmatprep.subr.mxu0 0.0
    %192 = vmatpush1.msra.mxu0 0.0
    %193 = vmatprep.subr.mxu0 0.0
    %194 = vmatpush1.msra.mxu0 0.0
    %195 = vmatprep.subr.mxu0 0.0
    %196 = vmatpush1.msra.mxu0 0.0
    %197 = vmatprep.subr.mxu0 0.0
    %198 = vmatpush1.msra.mxu0 0.0
    %199 = vmatprep.subr.mxu0 0.0
    %200 = vmatpush1.msra.mxu0 0.0
    %201 = vmatprep.subr.mxu0 0.0
    %202 = vmatpush1.msra.mxu0 0.0
    %203 = vmatprep.subr.mxu0 0.0
    %204 = vmatpush1.msra.mxu0 0.0
    %205 = vmatprep.subr.mxu0 0.0
    %206 = vmatpush1.msra.mxu0 0.0
    %207 = vmatprep.subr.mxu0 0.0
    %208 = vmatpush1.msra.mxu0 0.0
    %209 = vmatprep.subr.mxu0 0.0
    %210 = vmatpush1.msra.mxu0 0.0
    %211 = vmatprep.subr.mxu0 0.0
    %212 = vmatpush1.msra.mxu0 0.0
    %213 = vmatprep.mubr.f32.mxu0 0.0
    %214 = vmatmul.mubr.f32.gmra.mrb[0].mxu0 %v123
    %v215 = vpop.f32.mrb[0].mxu0
    %v216 = vadd.f32 %v147, %v215
    %v217 = vpop.f32.mrb[0].mxu0
    %218 = vdwg.mxu0
    %v219 = vtanh.pop %v216
    %s220 = scalar_lea.vmem [#allocation2], 256
    %v221 = vld [vmem:[%s220] sm:$0xff]
    %v222 = vld [vmem:[%s220 + $0x8] sm:$0xff]
    %v223 = vld [vmem:[%s220 + $0x10] sm:$0xff]
    %v224 = vld [vmem:[%s220 + $0x18] sm:$0xff]
    %v225 = vld [vmem:[%s220 + $0x20] sm:$0xff]
    %v226 = vld [vmem:[%s220 + $0x28] sm:$0xff]
    %v227 = vld [vmem:[%s220 + $0x30] sm:$0xff]
    %v228 = vld [vmem:[%s220 + $0x38] sm:$0xff]
    %v229 = vld [vmem:[%s220 + $0x40] sm:$0xff]
    %v230 = vld [vmem:[%s220 + $0x48] sm:$0xff]
    %v231 = vld [vmem:[%s220 + $0x50] sm:$0xff]
    %v232 = vld [vmem:[%s220 + $0x58] sm:$0xff]
    %v233 = vld [vmem:[%s220 + $0x60] sm:$0xff]
    %v234 = vld [vmem:[%s220 + $0x68] sm:$0xff]
    %v235 = vld [vmem:[%s220 + $0x70] sm:$0xff]
    %v236 = vld [vmem:[%s220 + $0x78] sm:$0xff]
    %s237 = scalar_lea.vmem %s2, 2
    %v238 = vld [vmem:[%s237] sm:$0x1]
    %v240 = vlaneseq
    %v241 = vshrl.u32 %v240, 7
    %v242 = vsub.s32 0, %v241
    %v243 = vrot.slane %v238, %v242
    %245 = vmatprep.subr.mxu0 0.0
    %246 = vmatpush1.msra.mxu0 %v221
    %247 = vmatprep.subr.mxu0 0.0
    %248 = vmatpush1.msra.mxu0 %v222
    %249 = vmatprep.subr.mxu0 0.0
    %250 = vmatpush1.msra.mxu0 %v223
    %251 = vmatprep.subr.mxu0 0.0
    %252 = vmatpush1.msra.mxu0 %v224
    %253 = vmatprep.subr.mxu0 0.0
    %254 = vmatpush1.msra.mxu0 %v225
    %255 = vmatprep.subr.mxu0 0.0
    %256 = vmatpush1.msra.mxu0 %v226
    %257 = vmatprep.subr.mxu0 0.0
    %258 = vmatpush1.msra.mxu0 %v227
    %259 = vmatprep.subr.mxu0 0.0
    %260 = vmatpush1.msra.mxu0 %v228
    %261 = vmatprep.subr.mxu0 0.0
    %262 = vmatpush1.msra.mxu0 %v229
    %263 = vmatprep.subr.mxu0 0.0
    %264 = vmatpush1.msra.mxu0 %v230
    %265 = vmatprep.subr.mxu0 0.0
    %266 = vmatpush1.msra.mxu0 %v231
    %267 = vmatprep.subr.mxu0 0.0
    %268 = vmatpush1.msra.mxu0 %v232
    %269 = vmatprep.subr.mxu0 0.0
    %270 = vmatpush1.msra.mxu0 %v233
    %271 = vmatprep.subr.mxu0 0.0
    %272 = vmatpush1.msra.mxu0 %v234
    %273 = vmatprep.subr.mxu0 0.0
    %274 = vmatpush1.msra.mxu0 %v235
    %275 = vmatprep.subr.mxu0 0.0
    %276 = vmatpush1.msra.mxu0 %v236
    %277 = vmatprep.subr.mxu0 0.0
    %278 = vmatpush1.msra.mxu0 0.0
    %279 = vmatprep.subr.mxu0 0.0
    %280 = vmatpush1.msra.mxu0 0.0
    %281 = vmatprep.subr.mxu0 0.0
    %282 = vmatpush1.msra.mxu0 0.0
    %283 = vmatprep.subr.mxu0 0.0
    %284 = vmatpush1.msra.mxu0 0.0
    %285 = vmatprep.subr.mxu0 0.0
    %286 = vmatpush1.msra.mxu0 0.0
    %287 = vmatprep.subr.mxu0 0.0
    %288 = vmatpush1.msra.mxu0 0.0
    %289 = vmatprep.subr.mxu0 0.0
    %290 = vmatpush1.msra.mxu0 0.0
    %291 = vmatprep.subr.mxu0 0.0
    %292 = vmatpush1.msra.mxu0 0.0
    %293 = vmatprep.subr.mxu0 0.0
    %294 = vmatpush1.msra.mxu0 0.0
    %295 = vmatprep.subr.mxu0 0.0
    %296 = vmatpush1.msra.mxu0 0.0
    %297 = vmatprep.subr.mxu0 0.0
    %298 = vmatpush1.msra.mxu0 0.0
    %299 = vmatprep.subr.mxu0 0.0
    %300 = vmatpush1.msra.mxu0 0.0
    %301 = vmatprep.subr.mxu0 0.0
    %302 = vmatpush1.msra.mxu0 0.0
    %303 = vmatprep.subr.mxu0 0.0
    %304 = vmatpush1.msra.mxu0 0.0
    %305 = vmatprep.subr.mxu0 0.0
    %306 = vmatpush1.msra.mxu0 0.0
    %307 = vmatprep.subr.mxu0 0.0
    %308 = vmatpush1.msra.mxu0 0.0
    %309 = vmatprep.mubr.f32.mxu0 0.0
    %310 = vmatmul.mubr.f32.gmra.mrb[0].mxu0 %v219
    %v311 = vpop.f32.mrb[0].mxu0
    %v312 = vadd.f32 %v243, %v311
    %v313 = vpop.f32.mrb[0].mxu0
    %314 = vdwg.mxu0
    %v315 = vtanh.pop %v312
    %s316 = scalar_lea.vmem [#allocation2], 384
    %v317 = vld [vmem:[%s316] sm:$0xff]
    %v318 = vld [vmem:[%s316 + $0x8] sm:$0xff]
    %v319 = vld [vmem:[%s316 + $0x10] sm:$0xff]
    %v320 = vld [vmem:[%s316 + $0x18] sm:$0xff]
    %v321 = vld [vmem:[%s316 + $0x20] sm:$0xff]
    %v322 = vld [vmem:[%s316 + $0x28] sm:$0xff]
    %v323 = vld [vmem:[%s316 + $0x30] sm:$0xff]
    %v324 = vld [vmem:[%s316 + $0x38] sm:$0xff]
    %v325 = vld [vmem:[%s316 + $0x40] sm:$0xff]
    %v326 = vld [vmem:[%s316 + $0x48] sm:$0xff]
    %v327 = vld [vmem:[%s316 + $0x50] sm:$0xff]
    %v328 = vld [vmem:[%s316 + $0x58] sm:$0xff]
    %v329 = vld [vmem:[%s316 + $0x60] sm:$0xff]
    %v330 = vld [vmem:[%s316 + $0x68] sm:$0xff]
    %v331 = vld [vmem:[%s316 + $0x70] sm:$0xff]
    %v332 = vld [vmem:[%s316 + $0x78] sm:$0xff]
    %s333 = scalar_lea.vmem %s2, 3
    %v334 = vld [vmem:[%s333] sm:$0x1]
    %v336 = vlaneseq
    %v337 = vshrl.u32 %v336, 7
    %v338 = vsub.s32 0, %v337
    %v339 = vrot.slane %v334, %v338
    %341 = vmatprep.subr.mxu0 0.0
    %342 = vmatpush1.msra.mxu0 %v317
    %343 = vmatprep.subr.mxu0 0.0
    %344 = vmatpush1.msra.mxu0 %v318
    %345 = vmatprep.subr.mxu0 0.0
    %346 = vmatpush1.msra.mxu0 %v319
    %347 = vmatprep.subr.mxu0 0.0
    %348 = vmatpush1.msra.mxu0 %v320
    %349 = vmatprep.subr.mxu0 0.0
    %350 = vmatpush1.msra.mxu0 %v321
    %351 = vmatprep.subr.mxu0 0.0
    %352 = vmatpush1.msra.mxu0 %v322
    %353 = vmatprep.subr.mxu0 0.0
    %354 = vmatpush1.msra.mxu0 %v323
    %355 = vmatprep.subr.mxu0 0.0
    %356 = vmatpush1.msra.mxu0 %v324
    %357 = vmatprep.subr.mxu0 0.0
    %358 = vmatpush1.msra.mxu0 %v325
    %359 = vmatprep.subr.mxu0 0.0
    %360 = vmatpush1.msra.mxu0 %v326
    %361 = vmatprep.subr.mxu0 0.0
    %362 = vmatpush1.msra.mxu0 %v327
    %363 = vmatprep.subr.mxu0 0.0
    %364 = vmatpush1.msra.mxu0 %v328
    %365 = vmatprep.subr.mxu0 0.0
    %366 = vmatpush1.msra.mxu0 %v329
    %367 = vmatprep.subr.mxu0 0.0
    %368 = vmatpush1.msra.mxu0 %v330
    %369 = vmatprep.subr.mxu0 0.0
    %370 = vmatpush1.msra.mxu0 %v331
    %371 = vmatprep.subr.mxu0 0.0
    %372 = vmatpush1.msra.mxu0 %v332
    %373 = vmatprep.subr.mxu0 0.0
    %374 = vmatpush1.msra.mxu0 0.0
    %375 = vmatprep.subr.mxu0 0.0
    %376 = vmatpush1.msra.mxu0 0.0
    %377 = vmatprep.subr.mxu0 0.0
    %378 = vmatpush1.msra.mxu0 0.0
    %379 = vmatprep.subr.mxu0 0.0
    %380 = vmatpush1.msra.mxu0 0.0
    %381 = vmatprep.subr.mxu0 0.0
    %382 = vmatpush1.msra.mxu0 0.0
    %383 = vmatprep.subr.mxu0 0.0
    %384 = vmatpush1.msra.mxu0 0.0
    %385 = vmatprep.subr.mxu0 0.0
    %386 = vmatpush1.msra.mxu0 0.0
    %387 = vmatprep.subr.mxu0 0.0
    %388 = vmatpush1.msra.mxu0 0.0
    %389 = vmatprep.subr.mxu0 0.0
    %390 = vmatpush1.msra.mxu0 0.0
    %391 = vmatprep.subr.mxu0 0.0
    %392 = vmatpush1.msra.mxu0 0.0
    %393 = vmatprep.subr.mxu0 0.0
    %394 = vmatpush1.msra.mxu0 0.0
    %395 = vmatprep.subr.mxu0 0.0
    %396 = vmatpush1.msra.mxu0 0.0
    %397 = vmatprep.subr.mxu0 0.0
    %398 = vmatpush1.msra.mxu0 0.0
    %399 = vmatprep.subr.mxu0 0.0
    %400 = vmatpush1.msra.mxu0 0.0
    %401 = vmatprep.subr.mxu0 0.0
    %402 = vmatpush1.msra.mxu0 0.0
    %403 = vmatprep.subr.mxu0 0.0
    %404 = vmatpush1.msra.mxu0 0.0
    %405 = vmatprep.mubr.f32.mxu0 0.0
    %406 = vmatmul.mubr.f32.gmra.mrb[0].mxu0 %v315
    %v407 = vpop.f32.mrb[0].mxu0
    %v408 = vadd.f32 %v339, %v407
    %v409 = vpop.f32.mrb[0].mxu0
    %410 = vdwg.mxu0
    %v411 = vtanh.pop %v408
    %s412 = scalar_lea.vmem [#allocation2], 512
    %v413 = vld [vmem:[%s412] sm:$0xff]
    %v414 = vld [vmem:[%s412 + $0x8] sm:$0xff]
    %v415 = vld [vmem:[%s412 + $0x10] sm:$0xff]
    %v416 = vld [vmem:[%s412 + $0x18] sm:$0xff]
    %v417 = vld [vmem:[%s412 + $0x20] sm:$0xff]
    %v418 = vld [vmem:[%s412 + $0x28] sm:$0xff]
    %v419 = vld [vmem:[%s412 + $0x30] sm:$0xff]
    %v420 = vld [vmem:[%s412 + $0x38] sm:$0xff]
    %v421 = vld [vmem:[%s412 + $0x40] sm:$0xff]
    %v422 = vld [vmem:[%s412 + $0x48] sm:$0xff]
    %v423 = vld [vmem:[%s412 + $0x50] sm:$0xff]
    %v424 = vld [vmem:[%s412 + $0x58] sm:$0xff]
    %v425 = vld [vmem:[%s412 + $0x60] sm:$0xff]
    %v426 = vld [vmem:[%s412 + $0x68] sm:$0xff]
    %v427 = vld [vmem:[%s412 + $0x70] sm:$0xff]
    %v428 = vld [vmem:[%s412 + $0x78] sm:$0xff]
    %s429 = scalar_lea.vmem %s2, 4
    %v430 = vld [vmem:[%s429] sm:$0x1]
    %v432 = vlaneseq
    %v433 = vshrl.u32 %v432, 7
    %v434 = vsub.s32 0, %v433
    %v435 = vrot.slane %v430, %v434
    %437 = vmatprep.subr.mxu0 0.0
    %438 = vmatpush1.msra.mxu0 %v413
    %439 = vmatprep.subr.mxu0 0.0
    %440 = vmatpush1.msra.mxu0 %v414
    %441 = vmatprep.subr.mxu0 0.0
    %442 = vmatpush1.msra.mxu0 %v415
    %443 = vmatprep.subr.mxu0 0.0
    %444 = vmatpush1.msra.mxu0 %v416
    %445 = vmatprep.subr.mxu0 0.0
    %446 = vmatpush1.msra.mxu0 %v417
    %447 = vmatprep.subr.mxu0 0.0
    %448 = vmatpush1.msra.mxu0 %v418
    %449 = vmatprep.subr.mxu0 0.0
    %450 = vmatpush1.msra.mxu0 %v419
    %451 = vmatprep.subr.mxu0 0.0
    %452 = vmatpush1.msra.mxu0 %v420
    %453 = vmatprep.subr.mxu0 0.0
    %454 = vmatpush1.msra.mxu0 %v421
    %455 = vmatprep.subr.mxu0 0.0
    %456 = vmatpush1.msra.mxu0 %v422
    %457 = vmatprep.subr.mxu0 0.0
    %458 = vmatpush1.msra.mxu0 %v423
    %459 = vmatprep.subr.mxu0 0.0
    %460 = vmatpush1.msra.mxu0 %v424
    %461 = vmatprep.subr.mxu0 0.0
    %462 = vmatpush1.msra.mxu0 %v425
    %463 = vmatprep.subr.mxu0 0.0
    %464 = vmatpush1.msra.mxu0 %v426
    %465 = vmatprep.subr.mxu0 0.0
    %466 = vmatpush1.msra.mxu0 %v427
    %467 = vmatprep.subr.mxu0 0.0
    %468 = vmatpush1.msra.mxu0 %v428
    %469 = vmatprep.subr.mxu0 0.0
    %470 = vmatpush1.msra.mxu0 0.0
    %471 = vmatprep.subr.mxu0 0.0
    %472 = vmatpush1.msra.mxu0 0.0
    %473 = vmatprep.subr.mxu0 0.0
    %474 = vmatpush1.msra.mxu0 0.0
    %475 = vmatprep.subr.mxu0 0.0
    %476 = vmatpush1.msra.mxu0 0.0
    %477 = vmatprep.subr.mxu0 0.0
    %478 = vmatpush1.msra.mxu0 0.0
    %479 = vmatprep.subr.mxu0 0.0
    %480 = vmatpush1.msra.mxu0 0.0
    %481 = vmatprep.subr.mxu0 0.0
    %482 = vmatpush1.msra.mxu0 0.0
    %483 = vmatprep.subr.mxu0 0.0
    %484 = vmatpush1.msra.mxu0 0.0
    %485 = vmatprep.subr.mxu0 0.0
    %486 = vmatpush1.msra.mxu0 0.0
    %487 = vmatprep.subr.mxu0 0.0
    %488 = vmatpush1.msra.mxu0 0.0
    %489 = vmatprep.subr.mxu0 0.0
    %490 = vmatpush1.msra.mxu0 0.0
    %491 = vmatprep.subr.mxu0 0.0
    %492 = vmatpush1.msra.mxu0 0.0
    %493 = vmatprep.subr.mxu0 0.0
    %494 = vmatpush1.msra.mxu0 0.0
    %495 = vmatprep.subr.mxu0 0.0
    %496 = vmatpush1.msra.mxu0 0.0
    %497 = vmatprep.subr.mxu0 0.0
    %498 = vmatpush1.msra.mxu0 0.0
    %499 = vmatprep.subr.mxu0 0.0
    %500 = vmatpush1.msra.mxu0 0.0
    %501 = vmatprep.mubr.f32.mxu0 0.0
    %502 = vmatmul.mubr.f32.gmra.mrb[0].mxu0 %v411
    %v503 = vpop.f32.mrb[0].mxu0
    %v504 = vadd.f32 %v435, %v503
    %v505 = vpop.f32.mrb[0].mxu0
    %506 = vdwg.mxu0
    %507 = vst [vmem:[#allocation5] sm:$0xff] %v504
    // Predicated region
    $region18: #{dae_forward_packed.1} parent=1 // pred_check
      _
    $region19: #{dae_forward_packed.1} parent=1 // pred_check_branch
      %509 = sbr.rel (0) target = $region21
    $region20: #{dae_forward_packed.1} parent=1 // pred_region
      %s511 = ssub.s32 128, 128
      %512 = vsyncadd [#allocation4], %s511
      %s514 = sshll.u32 [#allocation5], 4
      %s515 = int_to_ptr.vmem [resolvable:$true] %s514
      %517 = dma.vmem_to_hbm [thread:$0]  %s515, 128, %s3, [#allocation4]
    $region21: #{dae_forward_packed.1} parent=1 // pred_fallthru
      _
    // Predicated region
    $region22: #{dae_forward_packed.1} parent=1 // pred_check
      _
    $region23: #{dae_forward_packed.1} parent=1 // pred_check_branch
      %519 = sbr.rel (0) target = $region25
    $region24: #{dae_forward_packed.1} parent=1 // pred_region
      %520 = dma.done [#allocation4], 128
    $region25: #{dae_forward_packed.1} parent=1 // pred_fallthru
      _
    %521 = vsyncpa [#allocation3], 1
    %522 = vsyncpa [#allocation4], 1

</llo_original>
